<compile_context>
chip_gen: v6e
topology: v6e:2x2x1
jax: 0.10.0
libtpu: 0.0.40
codegen_flags: <defaults>
</compile_context>

<pallas_src>
import functools

import jax
import jax.numpy as jnp
from jax.experimental import pallas as pl
from jax.experimental.pallas import tpu as pltpu


LN_EPS = 1e-5


def adapter_kernel(x_ref, w1_ref, b1_ref, w2_ref, b2_ref, o_ref, *, c_valid):
    """Fused LayerNorm + fc1 + relu + fc2 + residual on one (row_tile, Cp) tile."""
    cp = x_ref.shape[-1]
    x = x_ref[...].astype(jnp.float32)

    # LayerNorm statistics in f32 over the *valid* embed dim (padded columns
    # of x are zero, so the sum is unaffected; the variance masks them out).
    inv_c = 1.0 / float(c_valid)
    mean = jnp.sum(x, axis=-1, keepdims=True) * inv_c
    centered = x - mean
    if c_valid != cp:
        lane = jax.lax.broadcasted_iota(jnp.int32, centered.shape, 1)
        centered = jnp.where(lane < c_valid, centered, 0.0)
    var = jnp.sum(centered * centered, axis=-1, keepdims=True) * inv_c
    xn = centered * jax.lax.rsqrt(var + LN_EPS)
    # `x` / `centered` are not referenced again: their live ranges end here,
    # before the MXU section (residual re-reads x_ref below).

    # fc1 + relu: bf16 MXU operands, f32 accumulation.  Padded rows of W1'
    # are zero, padded columns of xn are zero -> math unchanged.
    h = jnp.dot(xn.astype(w1_ref.dtype), w1_ref[...],
                preferred_element_type=jnp.float32)
    h = jnp.maximum(h + b1_ref[...], 0.0)

    # fc2: padded adapter rows / padded output columns of W2 are zero.
    y = jnp.dot(h.astype(w2_ref.dtype), w2_ref[...],
                preferred_element_type=jnp.float32)
    y = y + b2_ref[...]

    # Residual add by re-reading the input tile (dropout is identity at
    # inference).  Padded output columns stay exactly zero and are sliced off.
    o_ref[...] = (y + x_ref[...].astype(jnp.float32)).astype(o_ref.dtype)


def prepare_adapter_params(gamma, beta, w1, b1, w2, b2,
                           *, compute_dtype=jnp.bfloat16):
    """One-time parameter transform (not a per-call cost).

    gamma, beta: (C,)   LayerNorm affine.
    w1: (C, Dh)         fc1 weight, transposed so the kernel does x @ w1.
    b1: (Dh,)           fc1 bias.
    w2: (Dh, C)         fc2 weight (transposed).
    b2: (C,)            fc2 bias.

    Folds the LayerNorm affine into fc1, zero-pads both the adapter dim and
    the embed dim up to multiples of 128 lanes (lane-dense MXU operands and
    output stores), and casts the weight matrices to `compute_dtype`.
    """
    C, Dh = w1.shape
    Dp = max(128, ((Dh + 127) // 128) * 128)
    Cp = max(128, ((C + 127) // 128) * 128)

    gamma = gamma.reshape(C).astype(jnp.float32)
    beta = beta.reshape(C).astype(jnp.float32)
    w1 = w1.astype(jnp.float32)
    b1 = b1.reshape(Dh).astype(jnp.float32)
    w2 = w2.astype(jnp.float32)
    b2 = b2.reshape(C).astype(jnp.float32)

    # (xn*gamma + beta) @ W1 + b1  ==  xn @ (gamma[:,None]*W1) + (beta @ W1 + b1)
    w1_folded = w1 * gamma[:, None]
    b1_folded = beta @ w1 + b1

    w1_p = jnp.zeros((Cp, Dp), jnp.float32).at[:C, :Dh].set(w1_folded)
    b1_p = jnp.zeros((1, Dp), jnp.float32).at[0, :Dh].set(b1_folded)
    w2_p = jnp.zeros((Dp, Cp), jnp.float32).at[:Dh, :C].set(w2)
    b2_p = jnp.zeros((1, Cp), jnp.float32).at[0, :C].set(b2)

    return (w1_p.astype(compute_dtype), b1_p,
            w2_p.astype(compute_dtype), b2_p)


def _tpu_vmem_capacity_bytes():
    """Physical VMEM per TensorCore; conservative 64 MiB fallback (v7x)."""
    try:
        cap = int(pltpu.get_tpu_info().vmem_capacity_bytes)
        if cap > 0:
            return cap
    except Exception:
        pass
    return 64 * 1024 * 1024


def _tpu_num_tensorcores():
    """TensorCores per chip (1 on v5e/v6e, 2 on v7x); fallback 1."""
    try:
        info = pltpu.get_tpu_info()
        for name in ("num_cores", "core_count", "num_tensorcores",
                     "tensor_core_count"):
            v = getattr(info, name, None)
            if v:
                return int(v)
    except Exception:
        pass
    return 1


def _per_row_vmem_bytes(Cp, Dp, x_bytes):
    """VMEM per token row: double-buffered x + out tiles plus the worst-case
    simultaneously-live f32 intermediates (xn/centered, h, y) after the
    residual-reload fix."""
    return 2 * Cp * x_bytes + 2 * Cp * x_bytes + (Dp + 3 * Cp) * 4


def _weight_vmem_bytes(Cp, Dp, w_bytes):
    """Loop-invariant weights/biases, still double-buffered by the pipeline."""
    return 2 * (2 * Cp * Dp * w_bytes + (Dp + Cp) * 4)


def _choose_row_tile(n_rows, Cp, Dp, x_bytes, w_bytes,
                     vmem_budget_bytes, min_blocks=1):
    """Pick a large, lane/MXU-friendly row tile that fits the VMEM budget."""
    if n_rows <= 128:
        # Toy shapes: round up to a packed-sublane multiple for the dtype
        # (8 rows/vreg for f32, 16 for bf16, 32 for int8/fp8).
        sub = 8 * max(1, 4 // max(1, x_bytes))
        return max(sub, ((n_rows + sub - 1) // sub) * sub)
    per_row = _per_row_vmem_bytes(Cp, Dp, x_bytes)
    weight_bytes = _weight_vmem_bytes(Cp, Dp, w_bytes)
    tile = 1024
    while tile > 128 and (tile * per_row + weight_bytes > vmem_budget_bytes
                          or pl.cdiv(n_rows, tile) < min_blocks):
        tile //= 2
    return tile


def adapter_forward(x, w1_p, b1_p, w2_p, b2_p, *, row_tile=None):
    """x: (T, B, C); parameters as produced by `prepare_adapter_params`."""
    T, B, C = x.shape
    Cp, Dp = w1_p.shape
    assert w2_p.shape == (Dp, Cp) and Cp % 128 == 0 and Dp % 128 == 0
    assert C <= Cp
    N = T * B
    xf = x.reshape(N, C)

    x_bytes = jnp.dtype(x.dtype).itemsize
    w_bytes = jnp.dtype(w1_p.dtype).itemsize

    # Generation-aware VMEM budgeting: never request more than ~85% of the
    # physical VMEM (64 MiB on v7x, 128 MiB on v5e/v6e); give the row-tile
    # chooser a consistent budget with ~15% headroom for compiler scratch.
    vmem_cap = _tpu_vmem_capacity_bytes()
    vmem_ceiling = int(0.85 * vmem_cap)
    chooser_budget = int(0.85 * vmem_ceiling)
    num_cores = _tpu_num_tensorcores()

    if row_tile is None:
        row_tile = _choose_row_tile(N, Cp, Dp, x_bytes, w_bytes,
                                    vmem_budget_bytes=chooser_budget,
                                    min_blocks=num_cores)

    # Pad tokens up to a tile multiple; on multi-TC chips round the grid up
    # to a multiple of the core count so the parallel split is balanced.
    n_blocks = pl.cdiv(N, row_tile)
    if num_cores > 1 and n_blocks >= num_cores:
        n_blocks = ((n_blocks + num_cores - 1) // num_cores) * num_cores
    Np = n_blocks * row_tile
    if (Np, Cp) != (N, C):
        # Padded rows/cols are zeros: LN of a zero row is finite, padded
        # weight rows/cols are zero, and the padding is sliced off below.
        xf = jnp.pad(xf, ((0, Np - N), (0, Cp - C)))

    # Explicit VMEM limit from the tile-size estimate (+20% slack), clamped
    # to the per-generation ceiling.
    est = (row_tile * _per_row_vmem_bytes(Cp, Dp, x_bytes)
           + _weight_vmem_bytes(Cp, Dp, w_bytes))
    vmem_limit = int(min(vmem_ceiling, max(int(1.2 * est), 16 * 1024 * 1024)))

    kernel = functools.partial(adapter_kernel, c_valid=C)
    out = pl.pallas_call(
        kernel,
        out_shape=jax.ShapeDtypeStruct((Np, Cp), x.dtype),
        grid=(n_blocks,),
        in_specs=[
            pl.BlockSpec((row_tile, Cp), lambda i: (i, 0)),  # x tile (streamed)
            pl.BlockSpec((Cp, Dp), lambda i: (0, 0)),        # W1' (folded, padded)
            pl.BlockSpec((1, Dp), lambda i: (0, 0)),         # b1'
            pl.BlockSpec((Dp, Cp), lambda i: (0, 0)),        # W2 (padded)
            pl.BlockSpec((1, Cp), lambda i: (0, 0)),         # b2
        ],
        out_specs=pl.BlockSpec((row_tile, Cp), lambda i: (i, 0)),
        compiler_params=pltpu.CompilerParams(
            dimension_semantics=("parallel",),
            vmem_limit_bytes=vmem_limit),
    )(xf, w1_p, b1_p, w2_p, b2_p)

    return out[:N, :C].reshape(T, B, C)


def reference_forward(x, gamma, beta, w1, b1, w2, b2):
    """Pure-JAX f32 reference using the original (unfolded, unpadded) params."""
    residual = x
    mean = jnp.mean(x, axis=-1, keepdims=True)
    var = jnp.mean((x - mean) ** 2, axis=-1, keepdims=True)
    xn = (x - mean) / jnp.sqrt(var + LN_EPS) * gamma + beta
    h = jnp.maximum(xn @ w1 + b1, 0.0)
    y = h @ w2 + b2
    return y + residual


if __name__ == "__main__":
    # Small shapes consistent with the module: encoder_embed_dim=32,
    # adapter_dim = embed_dim // 4 = 8, seq=8, batch=2.
    T, B, C = 8, 2, 32
    Dh = C // 4

    key = jax.random.PRNGKey(0)
    k_x, k_w1, k_b1, k_w2, k_b2, k_g, k_be = jax.random.split(key, 7)

    x = jax.random.normal(k_x, (T, B, C), dtype=jnp.float32)

    # nn.Linear stores (out, in); keep the math x @ W^T by transposing once.
    w1_t = jax.random.normal(k_w1, (Dh, C), dtype=jnp.float32) * 0.1  # fc1.weight
    b1 = jax.random.normal(k_b1, (Dh,), dtype=jnp.float32) * 0.1      # fc1.bias
    w2_t = jax.random.normal(k_w2, (C, Dh), dtype=jnp.float32) * 0.1  # fc2.weight
    b2 = jax.random.normal(k_b2, (C,), dtype=jnp.float32) * 0.1       # fc2.bias
    gamma = 1.0 + 0.1 * jax.random.normal(k_g, (C,), dtype=jnp.float32)
    beta = 0.1 * jax.random.normal(k_be, (C,), dtype=jnp.float32)

    w1 = w1_t.T  # (C, Dh)
    w2 = w2_t.T  # (Dh, C)

    # One-time parameter prep: fold LN affine, pad adapter and embed dims to
    # 128-lane multiples, cast weight matrices to bf16 for the MXU.
    w1_p, b1_p, w2_p, b2_p = prepare_adapter_params(gamma, beta, w1, b1, w2, b2)

    out = adapter_forward(x, w1_p, b1_p, w2_p, b2_p)
    out = jax.block_until_ready(out)

    ref = reference_forward(x, gamma, beta, w1, b1, w2, b2)
    assert out.shape == (T, B, C)
    # bf16 MXU operands (incl. folded LN affine) with f32 accumulation:
    # tolerance loosened vs pure f32.
    assert jnp.allclose(out, ref, atol=3e-2, rtol=3e-2), float(
        jnp.max(jnp.abs(out - ref)))

    print("KERNEL_OK")
</pallas_src>

<mosaic_0001>
module attributes {stable_mosaic.version = 11 : i64} {
  func.func @adapter_kernel(%arg0: i32, %arg1: memref<16x128xf32, #tpu.memory_space<vmem>>, %arg2: memref<128x128xbf16, #tpu.memory_space<vmem>>, %arg3: memref<1x128xf32, #tpu.memory_space<vmem>>, %arg4: memref<128x128xbf16, #tpu.memory_space<vmem>>, %arg5: memref<1x128xf32, #tpu.memory_space<vmem>>, %arg6: memref<16x128xf32, #tpu.memory_space<vmem>>) attributes {dimension_semantics = [#tpu.dimension_semantics<parallel>], iteration_bounds = array<i64: 1>, scalar_prefetch = 0 : i64, scratch_operands = 0 : i64, tpu.core_type = #tpu.core_type<tc>, window_params = [{transform_indices = @transform_0, window_bounds = array<i64: 16, 128>}, {pipeline_mode = #tpu.pipeline_mode<synchronous>, transform_indices = @transform_1, window_bounds = array<i64: 128, 128>}, {pipeline_mode = #tpu.pipeline_mode<synchronous>, transform_indices = @transform_2, window_bounds = array<i64: 1, 128>}, {pipeline_mode = #tpu.pipeline_mode<synchronous>, transform_indices = @transform_3, window_bounds = array<i64: 128, 128>}, {pipeline_mode = #tpu.pipeline_mode<synchronous>, transform_indices = @transform_4, window_bounds = array<i64: 1, 128>}, {transform_indices = @transform_5, window_bounds = array<i64: 16, 128>}]} {
    %c0 = arith.constant 0 : index
    %c0_0 = arith.constant 0 : index
    %0 = vector.load %arg1[%c0, %c0_0] : memref<16x128xf32, #tpu.memory_space<vmem>>, vector<16x128xf32>
    %cst = arith.constant dense<0.000000e+00> : vector<16xf32>
    %1 = vector.multi_reduction <add>, %0, %cst [1] : vector<16x128xf32> to vector<16xf32>
    %2 = vector.shape_cast %1 : vector<16xf32> to vector<16x1xf32>
    %cst_1 = arith.constant 3.125000e-02 : f32
    %3 = vector.broadcast %cst_1 : f32 to vector<16x1xf32>
    %4 = arith.mulf %2, %3 : vector<16x1xf32>
    %5 = vector.broadcast %4 : vector<16x1xf32> to vector<16x128xf32>
    %6 = arith.subf %0, %5 : vector<16x128xf32>
    %7 = tpu.iota {dimensions = array<i32: 1>} : vector<16x128xi32>
    %c32_i32 = arith.constant 32 : i32
    %8 = vector.broadcast %c32_i32 : i32 to vector<16x128xi32>
    %9 = arith.cmpi slt, %7, %8 : vector<16x128xi32>
    %cst_2 = arith.constant 0.000000e+00 : f32
    %10 = vector.broadcast %cst_2 : f32 to vector<16x128xf32>
    %11 = arith.select %9, %6, %10 : vector<16x128xi1>, vector<16x128xf32>
    %12 = arith.mulf %11, %11 : vector<16x128xf32>
    %cst_3 = arith.constant dense<0.000000e+00> : vector<16xf32>
    %13 = vector.multi_reduction <add>, %12, %cst_3 [1] : vector<16x128xf32> to vector<16xf32>
    %14 = vector.shape_cast %13 : vector<16xf32> to vector<16x1xf32>
    %cst_4 = arith.constant 3.125000e-02 : f32
    %15 = vector.broadcast %cst_4 : f32 to vector<16x1xf32>
    %16 = arith.mulf %14, %15 : vector<16x1xf32>
    %cst_5 = arith.constant 9.99999974E-6 : f32
    %17 = vector.broadcast %cst_5 : f32 to vector<16x1xf32>
    %18 = arith.addf %16, %17 : vector<16x1xf32>
    %19 = math.rsqrt %18 : vector<16x1xf32>
    %20 = vector.broadcast %19 : vector<16x1xf32> to vector<16x128xf32>
    %21 = arith.mulf %11, %20 : vector<16x128xf32>
    %22 = arith.truncf %21 : vector<16x128xf32> to vector<16x128xbf16>
    %c0_6 = arith.constant 0 : index
    %c0_7 = arith.constant 0 : index
    %23 = vector.load %arg2[%c0_6, %c0_7] : memref<128x128xbf16, #tpu.memory_space<vmem>>, vector<128x128xbf16>
    %cst_8 = arith.constant dense<0.000000e+00> : vector<16x128xf32>
    %24 = tpu.matmul %22, %23, %cst_8 {dimension_numbers = #tpu.dot_dimension_numbers<[1], [0], [0], [1], [0, 0, 1, 1], [], []>} : vector<16x128xbf16>, vector<128x128xbf16>, vector<16x128xf32> -> vector<16x128xf32>
    %c0_9 = arith.constant 0 : index
    %c0_10 = arith.constant 0 : index
    %25 = vector.load %arg3[%c0_9, %c0_10] : memref<1x128xf32, #tpu.memory_space<vmem>>, vector<1x128xf32>
    %26 = vector.broadcast %25 : vector<1x128xf32> to vector<16x128xf32>
    %27 = arith.addf %24, %26 : vector<16x128xf32>
    %cst_11 = arith.constant 0.000000e+00 : f32
    %28 = vector.broadcast %cst_11 : f32 to vector<16x128xf32>
    %29 = arith.maximumf %27, %28 : vector<16x128xf32>
    %30 = arith.truncf %29 : vector<16x128xf32> to vector<16x128xbf16>
    %c0_12 = arith.constant 0 : index
    %c0_13 = arith.constant 0 : index
    %31 = vector.load %arg4[%c0_12, %c0_13] : memref<128x128xbf16, #tpu.memory_space<vmem>>, vector<128x128xbf16>
    %cst_14 = arith.constant dense<0.000000e+00> : vector<16x128xf32>
    %32 = tpu.matmul %30, %31, %cst_14 {dimension_numbers = #tpu.dot_dimension_numbers<[1], [0], [0], [1], [0, 0, 1, 1], [], []>} : vector<16x128xbf16>, vector<128x128xbf16>, vector<16x128xf32> -> vector<16x128xf32>
    %c0_15 = arith.constant 0 : index
    %c0_16 = arith.constant 0 : index
    %33 = vector.load %arg5[%c0_15, %c0_16] : memref<1x128xf32, #tpu.memory_space<vmem>>, vector<1x128xf32>
    %34 = vector.broadcast %33 : vector<1x128xf32> to vector<16x128xf32>
    %35 = arith.addf %32, %34 : vector<16x128xf32>
    %c0_17 = arith.constant 0 : index
    %c0_18 = arith.constant 0 : index
    %36 = vector.load %arg1[%c0_17, %c0_18] : memref<16x128xf32, #tpu.memory_space<vmem>>, vector<16x128xf32>
    %37 = arith.addf %35, %36 : vector<16x128xf32>
    %c0_19 = arith.constant 0 : index
    %c0_20 = arith.constant 0 : index
    %38 = vector.load %arg6[%c0_19, %c0_20] : memref<16x128xf32, #tpu.memory_space<vmem>>, vector<16x128xf32>
    tpu.vector_store %arg6[%c0_19, %c0_20], %37 {strides = array<i32>} : memref<16x128xf32, #tpu.memory_space<vmem>>, vector<16x128xf32>,
    return
  }
  func.func @transform_0(%arg0: i32) -> (i32, i32) {
    %c0_i32 = arith.constant 0 : i32
    %c0_i32_0 = arith.constant 0 : i32
    return %arg0, %c0_i32 : i32, i32
  }
  func.func @transform_1(%arg0: i32) -> (i32, i32) {
    %c0_i32 = arith.constant 0 : i32
    %c0_i32_0 = arith.constant 0 : i32
    %c0_i32_1 = arith.constant 0 : i32
    return %c0_i32, %c0_i32_0 : i32, i32
  }
  func.func @transform_2(%arg0: i32) -> (i32, i32) {
    %c0_i32 = arith.constant 0 : i32
    %c0_i32_0 = arith.constant 0 : i32
    %c0_i32_1 = arith.constant 0 : i32
    return %c0_i32, %c0_i32_0 : i32, i32
  }
  func.func @transform_3(%arg0: i32) -> (i32, i32) {
    %c0_i32 = arith.constant 0 : i32
    %c0_i32_0 = arith.constant 0 : i32
    %c0_i32_1 = arith.constant 0 : i32
    return %c0_i32, %c0_i32_0 : i32, i32
  }
  func.func @transform_4(%arg0: i32) -> (i32, i32) {
    %c0_i32 = arith.constant 0 : i32
    %c0_i32_0 = arith.constant 0 : i32
    %c0_i32_1 = arith.constant 0 : i32
    return %c0_i32, %c0_i32_0 : i32, i32
  }
  func.func @transform_5(%arg0: i32) -> (i32, i32) {
    %c0_i32 = arith.constant 0 : i32
    %c0_i32_0 = arith.constant 0 : i32
    return %arg0, %c0_i32 : i32, i32
  }
}

</mosaic_0001>

<llo_original>
// kernel: tpu_custom_call.1
$region0: #{tpu_custom_call.1}
  #allocation0 [shape = 'u32[]', space=smem, size = 0x4, offset = 0x4, fixed_abs, tag = 'smem constant byte address 0x4 - core index']
  #allocation1 [shape = 'u32[144,128]{1,0:T(1,128)}', space=vmem, size = 0x12000, scoped, tag = 'internal scratch']
  %s0 = inlined_call_operand.hbm [shape: f32[16,128], index: 0, kind: input, shape index: {}]
  %s1 = inlined_call_operand.hbm [shape: bf16[128,128], index: 1, kind: input, shape index: {}]
  %s2 = inlined_call_operand.vmem [shape: f32[1,128], index: 2, kind: input, shape index: {}]
  %s3 = inlined_call_operand.hbm [shape: bf16[128,128], index: 3, kind: input, shape index: {}]
  %s4 = inlined_call_operand.vmem [shape: f32[1,128], index: 4, kind: input, shape index: {}]
  %s5 = inlined_call_operand.hbm [shape: f32[16,128], index: 5, kind: output, shape index: {}]
  %s6 = sld [smem:[#allocation0]]
  $region42: #{tpu_custom_call.1} parent=0
    _
  %s8 = ssub.s32 1, %s6
  %s9 = scalar_select 0, %s8, %s6
  $region1: #{tpu_custom_call.1} parent=0
    #allocation2 [shape = 'u8[8192]{0}', space=vmem, size = 0x2000, scoped, tag = 'input window, operand 0, single buffered']
    #allocation3 [shape = 's32[1]{0}', space=sflag, size = 0x4, scoped, tag = 'scoped memory for tpu_custom_call.1']
    #allocation4 [shape = 's32[1]{0}', space=sflag, size = 0x4, scoped, tag = 'scoped memory for tpu_custom_call.1']
    #allocation5 [shape = 'u8[32768]{0}', space=vmem, size = 0x8000, scoped, tag = 'input window, operand 1, single buffered']
    #allocation6 [shape = 's32[1]{0}', space=sflag, size = 0x4, scoped, tag = 'scoped memory for tpu_custom_call.1']
    #allocation7 [shape = 'u8[32768]{0}', space=vmem, size = 0x8000, scoped, tag = 'input window, operand 3, single buffered']
    #allocation8 [shape = 'u8[8192]{0}', space=vmem, size = 0x2000, scoped, tag = 'output window, operand 0, single buffered']
    %10 = vsyncpa [#allocation3], 0
    %11 = vsyncpa [#allocation6], 0
    %12 = vsyncpa [#allocation4], 0
    // Predicated region
    $region2: #{tpu_custom_call.1} parent=1 // pred_check
      _
    $region3: #{tpu_custom_call.1} parent=1 // pred_check_branch
      %14 = sbr.rel (0) target = $region5
    $region4: #{tpu_custom_call.1} parent=1 // pred_region
      %s16 = ssub.s32 256, 256
      %17 = vsyncadd [#allocation3], %s16
      %s18 = sshll.u32 [#allocation2], 4
      %s19 = int_to_ptr.vmem [resolvable:$true] %s18
      %24 = dma.hbm_to_vmem [thread:$0]  %s0, 256, %s19, [#allocation3], 128, 128, 8
    $region5: #{tpu_custom_call.1} parent=1 // pred_fallthru
      _
    // Predicated region
    $region6: #{tpu_custom_call.1} parent=1 // pred_check
      _
    $region7: #{tpu_custom_call.1} parent=1 // pred_check_branch
      %26 = sbr.rel (0) target = $region9
    $region8: #{tpu_custom_call.1} parent=1 // pred_region
      %s28 = ssub.s32 1024, 1024
      %29 = vsyncadd [#allocation6], %s28
      %s30 = sshll.u32 [#allocation5], 4
      %s31 = int_to_ptr.vmem [resolvable:$true] %s30
      %36 = dma.hbm_to_vmem [thread:$0]  %s1, 1024, %s31, [#allocation6], 64, 64, 4
    $region9: #{tpu_custom_call.1} parent=1 // pred_fallthru
      _
    // Predicated region
    $region10: #{tpu_custom_call.1} parent=1 // pred_check
      _
    $region11: #{tpu_custom_call.1} parent=1 // pred_check_branch
      %38 = sbr.rel (0) target = $region13
    $region12: #{tpu_custom_call.1} parent=1 // pred_region
      _
    $region13: #{tpu_custom_call.1} parent=1 // pred_fallthru
      _
    // Predicated region
    $region14: #{tpu_custom_call.1} parent=1 // pred_check
      _
    $region15: #{tpu_custom_call.1} parent=1 // pred_check_branch
      %40 = sbr.rel (0) target = $region17
    $region16: #{tpu_custom_call.1} parent=1 // pred_region
      %s42 = ssub.s32 1024, 1024
      %43 = vsyncadd [#allocation6], %s42
      %s44 = sshll.u32 [#allocation7], 4
      %s45 = int_to_ptr.vmem [resolvable:$true] %s44
      %50 = dma.hbm_to_vmem [thread:$0]  %s3, 1024, %s45, [#allocation6], 64, 64, 4
    $region17: #{tpu_custom_call.1} parent=1 // pred_fallthru
      _
    // Predicated region
    $region18: #{tpu_custom_call.1} parent=1 // pred_check
      _
    $region19: #{tpu_custom_call.1} parent=1 // pred_check_branch
      %52 = sbr.rel (0) target = $region21
    $region20: #{tpu_custom_call.1} parent=1 // pred_region
      _
    $region21: #{tpu_custom_call.1} parent=1 // pred_fallthru
      _
    // Predicated region
    $region22: #{tpu_custom_call.1} parent=1 // pred_check
      _
    $region23: #{tpu_custom_call.1} parent=1 // pred_check_branch
      %54 = sbr.rel (0) target = $region25
    $region24: #{tpu_custom_call.1} parent=1 // pred_region
      %55 = dma.done [#allocation3], 256
    $region25: #{tpu_custom_call.1} parent=1 // pred_fallthru
      _
    // Predicated region
    $region26: #{tpu_custom_call.1} parent=1 // pred_check
      _
    $region27: #{tpu_custom_call.1} parent=1 // pred_check_branch
      %57 = sbr.rel (0) target = $region29
    $region28: #{tpu_custom_call.1} parent=1 // pred_region
      %58 = dma.done [#allocation6], 1024
    $region29: #{tpu_custom_call.1} parent=1 // pred_fallthru
      _
    // Predicated region
    $region30: #{tpu_custom_call.1} parent=1 // pred_check
      _
    $region31: #{tpu_custom_call.1} parent=1 // pred_check_branch
      %60 = sbr.rel (0) target = $region33
    $region32: #{tpu_custom_call.1} parent=1 // pred_region
      %61 = dma.done [#allocation6], 1024
    $region33: #{tpu_custom_call.1} parent=1 // pred_fallthru
      _
    %v63 = vld [vmem:[#allocation2] sm:$0xff]
    %v64 = vld [vmem:[#allocation2 + $0x8] sm:$0xff]
    %65 = vadd.xlane.f32.xlu0 %v63
    %v66 = vpop.xlane.xlu0 %65
    %67 = vadd.xlane.f32.xlu0 %v64
    %v68 = vpop.xlane.xlu0 %67
    %v69 = vmul.f32 %v66, 0.03125
    %v70 = vmul.f32 %v68, 0.03125
    %v71 = vsub.f32 %v63, %v69
    %v72 = vsub.f32 %v64, %v70
    %v73 = vlaneseq
    %v74 = vand.u32 %v73, 127
    %vm75 = vcmp.lt.s32.totalorder %v74, 32
    %v76 = vsel %vm75, %v71, 0.0
    %v77 = vsel %vm75, %v72, 0.0
    %v78 = vmul.f32 %v76, %v76
    %v79 = vmul.f32 %v77, %v77
    %80 = vadd.xlane.f32.xlu0 %v78
    %v81 = vpop.xlane.xlu0 %80
    %82 = vadd.xlane.f32.xlu0 %v79
    %v83 = vpop.xlane.xlu0 %82
    %v84 = vmul.f32 %v81, 0.03125
    %v85 = vmul.f32 %v83, 0.03125
    %v86 = vadd.f32 %v84, 1e-05
    %v87 = vadd.f32 %v85, 1e-05
    %v88 = vrsqrt.pop %v86
    %v89 = vrsqrt.pop %v87
    %v90 = vmul.f32 %v76, %v88
    %v91 = vmul.f32 %v77, %v89
    %v92 = vpack.c.bf16 %v91, %v90
    %v93 = vld [vmem:[#allocation5] sm:$0xf]
    %v94 = vld [vmem:[#allocation5 + $0x4] sm:$0xf]
    %v95 = vld [vmem:[#allocation5 + $0x8] sm:$0xf]
    %v96 = vld [vmem:[#allocation5 + $0xc] sm:$0xf]
    %v97 = vld [vmem:[#allocation5 + $0x10] sm:$0xf]
    %v98 = vld [vmem:[#allocation5 + $0x14] sm:$0xf]
    %v99 = vld [vmem:[#allocation5 + $0x18] sm:$0xf]
    %v100 = vld [vmem:[#allocation5 + $0x1c] sm:$0xf]
    %v101 = vld [vmem:[#allocation5 + $0x20] sm:$0xf]
    %v102 = vld [vmem:[#allocation5 + $0x24] sm:$0xf]
    %v103 = vld [vmem:[#allocation5 + $0x28] sm:$0xf]
    %v104 = vld [vmem:[#allocation5 + $0x2c] sm:$0xf]
    %v105 = vld [vmem:[#allocation5 + $0x30] sm:$0xf]
    %v106 = vld [vmem:[#allocation5 + $0x34] sm:$0xf]
    %v107 = vld [vmem:[#allocation5 + $0x38] sm:$0xf]
    %v108 = vld [vmem:[#allocation5 + $0x3c] sm:$0xf]
    %v109 = vld [vmem:[%s2] sm:$0x1]
    %v111 = vlaneseq
    %v112 = vshrl.u32 %v111, 7
    %v113 = vsub.s32 0, %v112
    %v114 = vrot.slane %v109, %v113
    %v132 = vunpack.c.l.b16 %v93
    %v133 = vunpack.c.l.b16 %v94
    %v134 = vunpack.c.l.b16 %v95
    %v135 = vunpack.c.l.b16 %v96
    %v136 = vunpack.c.l.b16 %v97
    %v137 = vunpack.c.l.b16 %v98
    %v138 = vunpack.c.l.b16 %v99
    %v139 = vunpack.c.l.b16 %v100
    %v140 = vunpack.c.l.b16 %v101
    %v141 = vunpack.c.l.b16 %v102
    %v142 = vunpack.c.l.b16 %v103
    %v143 = vunpack.c.l.b16 %v104
    %v144 = vunpack.c.l.b16 %v105
    %v145 = vunpack.c.l.b16 %v106
    %v146 = vunpack.c.l.b16 %v107
    %v147 = vunpack.c.l.b16 %v108
    %v148 = vpack.c.b16 %v133, %v132
    %v149 = vpack.c.b16 %v135, %v134
    %v150 = vpack.c.b16 %v137, %v136
    %v151 = vpack.c.b16 %v139, %v138
    %v152 = vpack.c.b16 %v141, %v140
    %v153 = vpack.c.b16 %v143, %v142
    %v154 = vpack.c.b16 %v145, %v144
    %v155 = vpack.c.b16 %v147, %v146
    %164 = vmatprep.subr.bf16.mxu0 0
    %165 = vmatpush1.bf16.msra.mxu0 %v155
    %166 = vmatprep.subr.bf16.mxu0 0
    %167 = vmatpush1.bf16.msra.mxu0 %v154
    %168 = vmatprep.subr.bf16.mxu0 0
    %169 = vmatpush1.bf16.msra.mxu0 %v153
    %170 = vmatprep.subr.bf16.mxu0 0
    %171 = vmatpush1.bf16.msra.mxu0 %v152
    %172 = vmatprep.subr.bf16.mxu0 0
    %173 = vmatpush1.bf16.msra.mxu0 %v151
    %174 = vmatprep.subr.bf16.mxu0 0
    %175 = vmatpush1.bf16.msra.mxu0 %v150
    %176 = vmatprep.subr.bf16.mxu0 0
    %177 = vmatpush1.bf16.msra.mxu0 %v149
    %178 = vmatprep.subr.bf16.mxu0 0
    %179 = vmatpush1.bf16.msra.mxu0 %v148
    %180 = vmatprep.subr.bf16.mxu0 0
    %181 = vmatpush2.bf16.msra.mxu0 0
    %182 = vmatprep.subr.bf16.mxu0 0
    %183 = vmatpush2.bf16.msra.mxu0 0
    %184 = vmatprep.subr.bf16.mxu0 0
    %185 = vmatpush2.bf16.msra.mxu0 0
    %186 = vmatprep.subr.bf16.mxu0 0
    %187 = vmatpush2.bf16.msra.mxu0 0
    %188 = vmatprep.subr.bf16.mxu0 0
    %189 = vmatpush2.bf16.msra.mxu0 0
    %190 = vmatprep.subr.bf16.mxu0 0
    %191 = vmatpush2.bf16.msra.mxu0 0
    %192 = vmatprep.subr.bf16.mxu0 0
    %193 = vmatpush2.bf16.msra.mxu0 0
    %194 = vmatprep.subr.bf16.mxu0 0
    %195 = vmatpush2.bf16.msra.mxu0 0
    %196 = vmatprep.mubr.bf16.mxu0 0
    %197 = vmatmul.mubr.bf16.gmra.mxu0 %v92
    %v198 = vpop.f32.mrf.mxu0
    %v199 = vadd.f32 %v114, %v198
    %v200 = vpop.f32.mrf.mxu0
    %v201 = vpop.f32.mrf.mxu0
    %v202 = vadd.f32 %v114, %v201
    %v203 = vpop.f32.mrf.mxu0
    %204 = vdwg.mxu0
    %v205 = vmax.f32 %v199, 0.0
    %v206 = vmax.f32 %v202, 0.0
    %v207 = vpack.c.bf16 %v206, %v205
    %v208 = vld [vmem:[#allocation7] sm:$0xf]
    %v209 = vld [vmem:[#allocation7 + $0x4] sm:$0xf]
    %v210 = vld [vmem:[#allocation7 + $0x8] sm:$0xf]
    %v211 = vld [vmem:[#allocation7 + $0xc] sm:$0xf]
    %v212 = vld [vmem:[#allocation7 + $0x10] sm:$0xf]
    %v213 = vld [vmem:[#allocation7 + $0x14] sm:$0xf]
    %v214 = vld [vmem:[#allocation7 + $0x18] sm:$0xf]
    %v215 = vld [vmem:[#allocation7 + $0x1c] sm:$0xf]
    %v216 = vld [vmem:[#allocation7 + $0x20] sm:$0xf]
    %v217 = vld [vmem:[#allocation7 + $0x24] sm:$0xf]
    %v218 = vld [vmem:[#allocation7 + $0x28] sm:$0xf]
    %v219 = vld [vmem:[#allocation7 + $0x2c] sm:$0xf]
    %v220 = vld [vmem:[#allocation7 + $0x30] sm:$0xf]
    %v221 = vld [vmem:[#allocation7 + $0x34] sm:$0xf]
    %v222 = vld [vmem:[#allocation7 + $0x38] sm:$0xf]
    %v223 = vld [vmem:[#allocation7 + $0x3c] sm:$0xf]
    %v224 = vld [vmem:[%s4] sm:$0x1]
    %v226 = vlaneseq
    %v227 = vshrl.u32 %v226, 7
    %v228 = vsub.s32 0, %v227
    %v229 = vrot.slane %v224, %v228
    %v247 = vunpack.c.l.b16 %v208
    %v248 = vunpack.c.l.b16 %v209
    %v249 = vunpack.c.l.b16 %v210
    %v250 = vunpack.c.l.b16 %v211
    %v251 = vunpack.c.l.b16 %v212
    %v252 = vunpack.c.l.b16 %v213
    %v253 = vunpack.c.l.b16 %v214
    %v254 = vunpack.c.l.b16 %v215
    %v255 = vunpack.c.l.b16 %v216
    %v256 = vunpack.c.l.b16 %v217
    %v257 = vunpack.c.l.b16 %v218
    %v258 = vunpack.c.l.b16 %v219
    %v259 = vunpack.c.l.b16 %v220
    %v260 = vunpack.c.l.b16 %v221
    %v261 = vunpack.c.l.b16 %v222
    %v262 = vunpack.c.l.b16 %v223
    %v263 = vpack.c.b16 %v248, %v247
    %v264 = vpack.c.b16 %v250, %v249
    %v265 = vpack.c.b16 %v252, %v251
    %v266 = vpack.c.b16 %v254, %v253
    %v267 = vpack.c.b16 %v256, %v255
    %v268 = vpack.c.b16 %v258, %v257
    %v269 = vpack.c.b16 %v260, %v259
    %v270 = vpack.c.b16 %v262, %v261
    %279 = vmatprep.subr.bf16.mxu0 0
    %280 = vmatpush1.bf16.msra.mxu0 %v270
    %281 = vmatprep.subr.bf16.mxu0 0
    %282 = vmatpush1.bf16.msra.mxu0 %v269
    %283 = vmatprep.subr.bf16.mxu0 0
    %284 = vmatpush1.bf16.msra.mxu0 %v268
    %285 = vmatprep.subr.bf16.mxu0 0
    %286 = vmatpush1.bf16.msra.mxu0 %v267
    %287 = vmatprep.subr.bf16.mxu0 0
    %288 = vmatpush1.bf16.msra.mxu0 %v266
    %289 = vmatprep.subr.bf16.mxu0 0
    %290 = vmatpush1.bf16.msra.mxu0 %v265
    %291 = vmatprep.subr.bf16.mxu0 0
    %292 = vmatpush1.bf16.msra.mxu0 %v264
    %293 = vmatprep.subr.bf16.mxu0 0
    %294 = vmatpush1.bf16.msra.mxu0 %v263
    %295 = vmatprep.subr.bf16.mxu0 0
    %296 = vmatpush2.bf16.msra.mxu0 0
    %297 = vmatprep.subr.bf16.mxu0 0
    %298 = vmatpush2.bf16.msra.mxu0 0
    %299 = vmatprep.subr.bf16.mxu0 0
    %300 = vmatpush2.bf16.msra.mxu0 0
    %301 = vmatprep.subr.bf16.mxu0 0
    %302 = vmatpush2.bf16.msra.mxu0 0
    %303 = vmatprep.subr.bf16.mxu0 0
    %304 = vmatpush2.bf16.msra.mxu0 0
    %305 = vmatprep.subr.bf16.mxu0 0
    %306 = vmatpush2.bf16.msra.mxu0 0
    %307 = vmatprep.subr.bf16.mxu0 0
    %308 = vmatpush2.bf16.msra.mxu0 0
    %309 = vmatprep.subr.bf16.mxu0 0
    %310 = vmatpush2.bf16.msra.mxu0 0
    %311 = vmatprep.mubr.bf16.mxu0 0
    %312 = vmatmul.mubr.bf16.gmra.mxu0 %v207
    %v313 = vpop.f32.mrf.mxu0
    %v314 = vadd.f32 %v229, %v313
    %v315 = vpop.f32.mrf.mxu0
    %v316 = vpop.f32.mrf.mxu0
    %v317 = vadd.f32 %v229, %v316
    %v318 = vpop.f32.mrf.mxu0
    %319 = vdwg.mxu0
    %v320 = vadd.f32 %v314, %v63
    %v321 = vadd.f32 %v317, %v64
    %322 = vst [vmem:[#allocation8] sm:$0xff] %v320
    %323 = vst [vmem:[#allocation8 + $0x8] sm:$0xff] %v321
    // Predicated region
    $region34: #{tpu_custom_call.1} parent=1 // pred_check
      _
    $region35: #{tpu_custom_call.1} parent=1 // pred_check_branch
      %325 = sbr.rel (0) target = $region37
    $region36: #{tpu_custom_call.1} parent=1 // pred_region
      %s327 = ssub.s32 256, 256
      %328 = vsyncadd [#allocation4], %s327
      %s329 = sshll.u32 [#allocation8], 4
      %s330 = int_to_ptr.vmem [resolvable:$true] %s329
      %335 = dma.vmem_to_hbm [thread:$0]  %s330, 256, %s5, [#allocation4], 128, 128, 8
    $region37: #{tpu_custom_call.1} parent=1 // pred_fallthru
      _
    // Predicated region
    $region38: #{tpu_custom_call.1} parent=1 // pred_check
      _
    $region39: #{tpu_custom_call.1} parent=1 // pred_check_branch
      %337 = sbr.rel (0) target = $region41
    $region40: #{tpu_custom_call.1} parent=1 // pred_region
      %338 = dma.done [#allocation4], 256
    $region41: #{tpu_custom_call.1} parent=1 // pred_fallthru
      _
    %339 = vsyncpa [#allocation3], 1
    %340 = vsyncpa [#allocation6], 1
    %341 = vsyncpa [#allocation4], 1

</llo_original>
